<compile_context>
chip_gen: v7x
topology: tpu7x:2x2x1
jax: 0.10.0
libtpu: 0.0.40
codegen_flags: <defaults>
</compile_context>

<pallas_src>
import functools

import jax
import jax.numpy as jnp
from jax.experimental import pallas as pl
from jax.experimental.pallas import tpu as pltpu


def _pairwise_dim_emb_kernel(co_ref, emb_ref, dim_emb_ref):
    """One grid step = one block of class-0 indices.

    co_ref      : (BI, 1, C1)  co-occurrence rows for this block
    emb_ref     : (BI, D, C1)  embedding blocks for this block
    dim_emb_ref : (D, 1)       resident accumulator (same block every step)
    """
    step = pl.program_id(0)

    @pl.when(step == 0)
    def _init():
        dim_emb_ref[...] = jnp.zeros_like(dim_emb_ref)

    emb = emb_ref[...]                       # (BI, D, C1)
    co = co_ref[...]                         # (BI, 1, C1) -> broadcasts over D sublanes
    prod = emb * co                          # VPU multiply
    # Reduce over class-0 block first (pure VPU elementwise adds), then a single
    # XLU lane reduction over C1 per grid step.
    acc2d = jnp.sum(prod, axis=0)            # (D, C1)
    dim_emb_ref[...] += jnp.sum(acc2d, axis=1, keepdims=True)   # (D, 1)


def _pick_block_c0(num_class0, dim_label_emb, num_class1,
                   budget_bytes=4 * 1024 * 1024):
    """Largest divisor of num_class0 whose double-buffered tile fits the budget."""
    per_i_bytes = (dim_label_emb * num_class1 + num_class1) * 4
    max_bi = max(1, budget_bytes // (2 * per_i_bytes))
    block_c0 = 1
    for cand in range(1, num_class0 + 1):
        if num_class0 % cand == 0 and cand <= max_bi:
            block_c0 = cand
    return block_c0


def pairwise_encoder_forward(pairwise_label_emb, co_occurrence, dim_label_emb):
    """Returns (pairwise_label_emb, pairwise_dim_emb) like PairwiseEncoder.forward()."""
    total_rows, C1 = pairwise_label_emb.shape
    C0, C1b = co_occurrence.shape
    D = dim_label_emb
    assert C1 == C1b, "co-occurrence / embedding class-1 mismatch"
    assert total_rows == C0 * D, "pairwise_label_emb rows must be num_class0 * dim_label_emb"

    # 3-D views: every block's last-two dims equal the full array dims, so any
    # class-0 block size is legal.
    emb3 = pairwise_label_emb.astype(jnp.float32).reshape(C0, D, C1)
    co3 = co_occurrence.astype(jnp.float32).reshape(C0, 1, C1)

    block_c0 = _pick_block_c0(C0, D, C1)
    grid = (C0 // block_c0,)

    dim_emb = pl.pallas_call(
        _pairwise_dim_emb_kernel,
        out_shape=jax.ShapeDtypeStruct((D, 1), jnp.float32),
        grid_spec=pltpu.PrefetchScalarGridSpec(
            num_scalar_prefetch=0,
            grid=grid,  # reduction over class-0 blocks
            in_specs=[
                pl.BlockSpec((block_c0, 1, C1), lambda s: (s, 0, 0)),  # co rows
                pl.BlockSpec((block_c0, D, C1), lambda s: (s, 0, 0)),  # emb blocks
            ],
            out_specs=pl.BlockSpec((D, 1), lambda s: (0, 0)),  # resident accumulator
        ),
        compiler_params=pltpu.CompilerParams(
            dimension_semantics=("arbitrary",),  # accumulation axis, sequential
        ),
    )(co3, emb3)

    # Parameter passthrough happens here in Python -- no kernel copy.
    return pairwise_label_emb, dim_emb


def pairwise_encoder_reference(pairwise_label_emb, co_occurrence, dim_label_emb):
    """Pure-JAX mirror of the PyTorch loop (eval mode)."""
    C0 = co_occurrence.shape[0]
    D = dim_label_emb
    dim_emb = jnp.zeros((D, 1), jnp.float32)
    for i in range(C0):
        emb_mat = pairwise_label_emb[i * D:(i + 1) * D, :]
        dim_emb = dim_emb + jnp.sum(co_occurrence[i] * emb_mat, axis=1, keepdims=True)
    return pairwise_label_emb, dim_emb


if __name__ == "__main__":
    # Small synthetic config: dim_label_emb=32, num_per_dim[dim0]=8, num_per_dim[dim1]=16
    dim_label_emb = 32
    num_class0 = 8
    num_class1 = 16

    key = jax.random.PRNGKey(0)
    k_emb, k_co = jax.random.split(key)

    # nn.Parameter(torch.randn(dim_label_emb * num_class0, num_class1))
    pairwise_label_emb = jax.random.normal(
        k_emb, (dim_label_emb * num_class0, num_class1), dtype=jnp.float32
    )
    # statistics[dim0][dim1] co-occurrence matrix: non-negative counts
    co_occurrence = jax.random.uniform(
        k_co, (num_class0, num_class1), dtype=jnp.float32, minval=0.0, maxval=5.0
    )

    fwd = jax.jit(functools.partial(pairwise_encoder_forward,
                                    dim_label_emb=dim_label_emb))
    emb_out, dim_emb = fwd(pairwise_label_emb, co_occurrence)
    jax.block_until_ready((emb_out, dim_emb))

    ref_emb, ref_dim_emb = pairwise_encoder_reference(
        pairwise_label_emb, co_occurrence, dim_label_emb
    )

    assert emb_out.shape == (dim_label_emb * num_class0, num_class1)
    assert dim_emb.shape == (dim_label_emb, 1)
    assert jnp.allclose(emb_out, ref_emb), "pairwise_label_emb passthrough mismatch"
    assert jnp.allclose(dim_emb, ref_dim_emb, rtol=1e-5, atol=1e-5), "pairwise_dim_emb mismatch"

    print("KERNEL_OK")
</pallas_src>

<mosaic_0001>
module attributes {stable_mosaic.version = 11 : i64} {
  func.func @_pairwise_dim_emb_kernel(%arg0: i32, %arg1: memref<8x1x16xf32, #tpu.memory_space<vmem>>, %arg2: memref<8x32x16xf32, #tpu.memory_space<vmem>>, %arg3: memref<32x1xf32, #tpu.memory_space<vmem>>) attributes {dimension_semantics = [#tpu.dimension_semantics<arbitrary>], iteration_bounds = array<i64: 1>, scalar_prefetch = 0 : i64, scratch_operands = 0 : i64, tpu.core_type = #tpu.core_type<tc>, window_params = [{transform_indices = @transform_0, window_bounds = array<i64: 8, 1, 16>}, {transform_indices = @transform_1, window_bounds = array<i64: 8, 32, 16>}, {pipeline_mode = #tpu.pipeline_mode<synchronous>, transform_indices = @transform_2, window_bounds = array<i64: 32, 1>}]} {
    %c0_i32 = arith.constant 0 : i32
    %0 = arith.cmpi eq, %arg0, %c0_i32 : i32
    %1 = arith.extui %0 : i1 to i32
    %c0_i32_0 = arith.constant 0 : i32
    %2 = arith.cmpi ne, %1, %c0_i32_0 : i32
    scf.if %2 {
      %cst_11 = arith.constant 0.000000e+00 : f32
      %13 = vector.broadcast %cst_11 : f32 to vector<32x1xf32>
      %c0_12 = arith.constant 0 : index
      %c0_13 = arith.constant 0 : index
      %14 = vector.load %arg3[%c0_12, %c0_13] : memref<32x1xf32, #tpu.memory_space<vmem>>, vector<32x1xf32>
      tpu.vector_store %arg3[%c0_12, %c0_13], %13 {strides = array<i32>} : memref<32x1xf32, #tpu.memory_space<vmem>>, vector<32x1xf32>,
    } else {
    }
    %c0 = arith.constant 0 : index
    %c0_1 = arith.constant 0 : index
    %c0_2 = arith.constant 0 : index
    %3 = vector.load %arg2[%c0, %c0_1, %c0_2] : memref<8x32x16xf32, #tpu.memory_space<vmem>>, vector<8x32x16xf32>
    %c0_3 = arith.constant 0 : index
    %c0_4 = arith.constant 0 : index
    %c0_5 = arith.constant 0 : index
    %4 = vector.load %arg1[%c0_3, %c0_4, %c0_5] : memref<8x1x16xf32, #tpu.memory_space<vmem>>, vector<8x1x16xf32>
    %5 = vector.broadcast %4 : vector<8x1x16xf32> to vector<8x32x16xf32>
    %6 = arith.mulf %3, %5 : vector<8x32x16xf32>
    %cst = arith.constant dense<0.000000e+00> : vector<32x16xf32>
    %7 = vector.multi_reduction <add>, %6, %cst [0] : vector<8x32x16xf32> to vector<32x16xf32>
    %c0_6 = arith.constant 0 : index
    %c0_7 = arith.constant 0 : index
    %8 = vector.load %arg3[%c0_6, %c0_7] : memref<32x1xf32, #tpu.memory_space<vmem>>, vector<32x1xf32>
    %cst_8 = arith.constant dense<0.000000e+00> : vector<32xf32>
    %9 = vector.multi_reduction <add>, %7, %cst_8 [1] : vector<32x16xf32> to vector<32xf32>
    %10 = vector.shape_cast %9 : vector<32xf32> to vector<32x1xf32>
    %11 = arith.addf %8, %10 : vector<32x1xf32>
    %c0_9 = arith.constant 0 : index
    %c0_10 = arith.constant 0 : index
    %12 = vector.load %arg3[%c0_9, %c0_10] : memref<32x1xf32, #tpu.memory_space<vmem>>, vector<32x1xf32>
    tpu.vector_store %arg3[%c0_9, %c0_10], %11 {strides = array<i32>} : memref<32x1xf32, #tpu.memory_space<vmem>>, vector<32x1xf32>,
    return
  }
  func.func @transform_0(%arg0: i32) -> (i32, i32, i32) {
    %c0_i32 = arith.constant 0 : i32
    %c0_i32_0 = arith.constant 0 : i32
    %c0_i32_1 = arith.constant 0 : i32
    return %arg0, %c0_i32, %c0_i32_0 : i32, i32, i32
  }
  func.func @transform_1(%arg0: i32) -> (i32, i32, i32) {
    %c0_i32 = arith.constant 0 : i32
    %c0_i32_0 = arith.constant 0 : i32
    %c0_i32_1 = arith.constant 0 : i32
    return %arg0, %c0_i32, %c0_i32_0 : i32, i32, i32
  }
  func.func @transform_2(%arg0: i32) -> (i32, i32) {
    %c0_i32 = arith.constant 0 : i32
    %c0_i32_0 = arith.constant 0 : i32
    %c0_i32_1 = arith.constant 0 : i32
    return %c0_i32, %c0_i32_0 : i32, i32
  }
}

</mosaic_0001>

<llo_original>
// kernel: pairwise_encoder_forward.1
$region0: #{pairwise_encoder_forward.1}
  #allocation0 [shape = 'u32[]', space=smem, size = 0x4, offset = 0x4, fixed_abs, tag = 'smem constant byte address 0x4 - core index']
  #allocation1 [shape = 'u32[144,128]{1,0:T(1,128)}', space=vmem, size = 0x12000, scoped, tag = 'internal scratch']
  %s0 = inlined_call_operand.vmem [shape: f32[8,1,16], index: 0, kind: input, shape index: {}]
  %s1 = inlined_call_operand.vmem [shape: f32[8,32,16], index: 1, kind: input, shape index: {}]
  %s2 = inlined_call_operand.vmem [shape: f32[32,1], index: 2, kind: output, shape index: {}]
  %s3 = sld [smem:[#allocation0]]
  $region22: #{pairwise_encoder_forward.1} parent=0
    _
  %s5 = ssub.s32 1, %s3
  %s6 = scalar_select 0, %s5, %s3
  // Predicated region
  $region2: #{pairwise_encoder_forward.1} parent=0 // pred_check
    _
  $region3: #{pairwise_encoder_forward.1} parent=0 // pred_check_branch
    %8 = sbr.rel (0) target = $region5
  $region4: #{pairwise_encoder_forward.1} parent=0 // pred_region
    _
  $region5: #{pairwise_encoder_forward.1} parent=0 // pred_fallthru
    _
  // Predicated region
  $region6: #{pairwise_encoder_forward.1} parent=0 // pred_check
    _
  $region7: #{pairwise_encoder_forward.1} parent=0 // pred_check_branch
    %10 = sbr.rel (0) target = $region9
  $region8: #{pairwise_encoder_forward.1} parent=0 // pred_region
    _
  $region9: #{pairwise_encoder_forward.1} parent=0 // pred_fallthru
    _
  %p11 = scmp.eq.s32.totalorder 0, 0
  // Predicated region
  $region10: #{pairwise_encoder_forward.1} parent=0 // pred_check
    %p12 = pneg %p11
  $region11: #{pairwise_encoder_forward.1} parent=0 // pred_check_branch
    %14 = sbr.rel (%p12) target = $region13
  $region12: #{pairwise_encoder_forward.1} parent=0 // pred_region
    %vm15 = vcmask 7168
    %16 = vst.msk [vmem:[%s2] sm:$0xff] %vm15, 0.0
    %17 = vst.msk [vmem:[%s2 + $0x8] sm:$0xff] %vm15, 0.0
    %18 = vst.msk [vmem:[%s2 + $0x10] sm:$0xff] %vm15, 0.0
    %19 = vst.msk [vmem:[%s2 + $0x18] sm:$0xff] %vm15, 0.0
  $region13: #{pairwise_encoder_forward.1} parent=0 // pred_fallthru
    _
  %v20 = vld [vmem:[%s1] sm:$0xff]
  %v21 = vld [vmem:[%s1 + $0x8] sm:$0xff]
  %v22 = vld [vmem:[%s1 + $0x10] sm:$0xff]
  %v23 = vld [vmem:[%s1 + $0x18] sm:$0xff]
  %v24 = vld [vmem:[%s1 + $0x20] sm:$0xff]
  %v25 = vld [vmem:[%s1 + $0x28] sm:$0xff]
  %v26 = vld [vmem:[%s1 + $0x30] sm:$0xff]
  %v27 = vld [vmem:[%s1 + $0x38] sm:$0xff]
  %v28 = vld [vmem:[%s1 + $0x40] sm:$0xff]
  %v29 = vld [vmem:[%s1 + $0x48] sm:$0xff]
  %v30 = vld [vmem:[%s1 + $0x50] sm:$0xff]
  %v31 = vld [vmem:[%s1 + $0x58] sm:$0xff]
  %v32 = vld [vmem:[%s1 + $0x60] sm:$0xff]
  %v33 = vld [vmem:[%s1 + $0x68] sm:$0xff]
  %v34 = vld [vmem:[%s1 + $0x70] sm:$0xff]
  %v35 = vld [vmem:[%s1 + $0x78] sm:$0xff]
  %v36 = vld [vmem:[%s1 + $0x80] sm:$0xff]
  %v37 = vld [vmem:[%s1 + $0x88] sm:$0xff]
  %v38 = vld [vmem:[%s1 + $0x90] sm:$0xff]
  %v39 = vld [vmem:[%s1 + $0x98] sm:$0xff]
  %v40 = vld [vmem:[%s1 + $0xa0] sm:$0xff]
  %v41 = vld [vmem:[%s1 + $0xa8] sm:$0xff]
  %v42 = vld [vmem:[%s1 + $0xb0] sm:$0xff]
  %v43 = vld [vmem:[%s1 + $0xb8] sm:$0xff]
  %v44 = vld [vmem:[%s1 + $0xc0] sm:$0xff]
  %v45 = vld [vmem:[%s1 + $0xc8] sm:$0xff]
  %v46 = vld [vmem:[%s1 + $0xd0] sm:$0xff]
  %v47 = vld [vmem:[%s1 + $0xd8] sm:$0xff]
  %v48 = vld [vmem:[%s1 + $0xe0] sm:$0xff]
  %v49 = vld [vmem:[%s1 + $0xe8] sm:$0xff]
  %v50 = vld [vmem:[%s1 + $0xf0] sm:$0xff]
  %v51 = vld [vmem:[%s1 + $0xf8] sm:$0xff]
  %v52 = vld [vmem:[%s0] sm:$0x1]
  %v53 = vld [vmem:[%s0 + $0x1] sm:$0x1]
  %v54 = vld [vmem:[%s0 + $0x2] sm:$0x1]
  %v55 = vld [vmem:[%s0 + $0x3] sm:$0x1]
  %v56 = vld [vmem:[%s0 + $0x4] sm:$0x1]
  %v57 = vld [vmem:[%s0 + $0x5] sm:$0x1]
  %v58 = vld [vmem:[%s0 + $0x6] sm:$0x1]
  %v59 = vld [vmem:[%s0 + $0x7] sm:$0x1]
  %v68 = vlaneseq
  %v69 = vshrl.u32 %v68, 7
  %v70 = vsub.s32 0, %v69
  %v71 = vrot.slane %v52, %v70
  %v72 = vlaneseq
  %v73 = vshrl.u32 %v72, 7
  %v74 = vsub.s32 0, %v73
  %v75 = vrot.slane %v53, %v74
  %v76 = vlaneseq
  %v77 = vshrl.u32 %v76, 7
  %v78 = vsub.s32 0, %v77
  %v79 = vrot.slane %v54, %v78
  %v80 = vlaneseq
  %v81 = vshrl.u32 %v80, 7
  %v82 = vsub.s32 0, %v81
  %v83 = vrot.slane %v55, %v82
  %v84 = vlaneseq
  %v85 = vshrl.u32 %v84, 7
  %v86 = vsub.s32 0, %v85
  %v87 = vrot.slane %v56, %v86
  %v88 = vlaneseq
  %v89 = vshrl.u32 %v88, 7
  %v90 = vsub.s32 0, %v89
  %v91 = vrot.slane %v57, %v90
  %v92 = vlaneseq
  %v93 = vshrl.u32 %v92, 7
  %v94 = vsub.s32 0, %v93
  %v95 = vrot.slane %v58, %v94
  %v96 = vlaneseq
  %v97 = vshrl.u32 %v96, 7
  %v98 = vsub.s32 0, %v97
  %v99 = vrot.slane %v59, %v98
  %v108 = vmul.f32 %v20, %v71
  %v109 = vmul.f32 %v21, %v71
  %v110 = vmul.f32 %v22, %v71
  %v111 = vmul.f32 %v23, %v71
  %v112 = vmul.f32 %v24, %v75
  %v113 = vmul.f32 %v25, %v75
  %v114 = vmul.f32 %v26, %v75
  %v115 = vmul.f32 %v27, %v75
  %v116 = vmul.f32 %v28, %v79
  %v117 = vmul.f32 %v29, %v79
  %v118 = vmul.f32 %v30, %v79
  %v119 = vmul.f32 %v31, %v79
  %v120 = vmul.f32 %v32, %v83
  %v121 = vmul.f32 %v33, %v83
  %v122 = vmul.f32 %v34, %v83
  %v123 = vmul.f32 %v35, %v83
  %v124 = vmul.f32 %v36, %v87
  %v125 = vmul.f32 %v37, %v87
  %v126 = vmul.f32 %v38, %v87
  %v127 = vmul.f32 %v39, %v87
  %v128 = vmul.f32 %v40, %v91
  %v129 = vmul.f32 %v41, %v91
  %v130 = vmul.f32 %v42, %v91
  %v131 = vmul.f32 %v43, %v91
  %v132 = vmul.f32 %v44, %v95
  %v133 = vmul.f32 %v45, %v95
  %v134 = vmul.f32 %v46, %v95
  %v135 = vmul.f32 %v47, %v95
  %v136 = vmul.f32 %v48, %v99
  %v137 = vmul.f32 %v49, %v99
  %v138 = vmul.f32 %v50, %v99
  %v139 = vmul.f32 %v51, %v99
  %vm140 = vcmask 130048
  %v141 = vsel %vm140, %v108, 0.0
  %v142 = vsel %vm140, %v112, 0.0
  %v143 = vadd.f32 %v141, %v142
  %v144 = vsel %vm140, %v116, 0.0
  %v145 = vadd.f32 %v143, %v144
  %v146 = vsel %vm140, %v120, 0.0
  %v147 = vadd.f32 %v145, %v146
  %v148 = vsel %vm140, %v124, 0.0
  %v149 = vadd.f32 %v147, %v148
  %v150 = vsel %vm140, %v128, 0.0
  %v151 = vadd.f32 %v149, %v150
  %v152 = vsel %vm140, %v132, 0.0
  %v153 = vadd.f32 %v151, %v152
  %v154 = vsel %vm140, %v136, 0.0
  %v155 = vadd.f32 %v153, %v154
  %v156 = vsel %vm140, %v109, 0.0
  %v157 = vsel %vm140, %v113, 0.0
  %v158 = vadd.f32 %v156, %v157
  %v159 = vsel %vm140, %v117, 0.0
  %v160 = vadd.f32 %v158, %v159
  %v161 = vsel %vm140, %v121, 0.0
  %v162 = vadd.f32 %v160, %v161
  %v163 = vsel %vm140, %v125, 0.0
  %v164 = vadd.f32 %v162, %v163
  %v165 = vsel %vm140, %v129, 0.0
  %v166 = vadd.f32 %v164, %v165
  %v167 = vsel %vm140, %v133, 0.0
  %v168 = vadd.f32 %v166, %v167
  %v169 = vsel %vm140, %v137, 0.0
  %v170 = vadd.f32 %v168, %v169
  %v171 = vsel %vm140, %v110, 0.0
  %v172 = vsel %vm140, %v114, 0.0
  %v173 = vadd.f32 %v171, %v172
  %v174 = vsel %vm140, %v118, 0.0
  %v175 = vadd.f32 %v173, %v174
  %v176 = vsel %vm140, %v122, 0.0
  %v177 = vadd.f32 %v175, %v176
  %v178 = vsel %vm140, %v126, 0.0
  %v179 = vadd.f32 %v177, %v178
  %v180 = vsel %vm140, %v130, 0.0
  %v181 = vadd.f32 %v179, %v180
  %v182 = vsel %vm140, %v134, 0.0
  %v183 = vadd.f32 %v181, %v182
  %v184 = vsel %vm140, %v138, 0.0
  %v185 = vadd.f32 %v183, %v184
  %v186 = vsel %vm140, %v111, 0.0
  %v187 = vsel %vm140, %v115, 0.0
  %v188 = vadd.f32 %v186, %v187
  %v189 = vsel %vm140, %v119, 0.0
  %v190 = vadd.f32 %v188, %v189
  %v191 = vsel %vm140, %v123, 0.0
  %v192 = vadd.f32 %v190, %v191
  %v193 = vsel %vm140, %v127, 0.0
  %v194 = vadd.f32 %v192, %v193
  %v195 = vsel %vm140, %v131, 0.0
  %v196 = vadd.f32 %v194, %v195
  %v197 = vsel %vm140, %v135, 0.0
  %v198 = vadd.f32 %v196, %v197
  %v199 = vsel %vm140, %v139, 0.0
  %v200 = vadd.f32 %v198, %v199
  %v201 = vld [vmem:[%s2] sm:$0xff]
  %v202 = vld [vmem:[%s2 + $0x8] sm:$0xff]
  %v203 = vld [vmem:[%s2 + $0x10] sm:$0xff]
  %v204 = vld [vmem:[%s2 + $0x18] sm:$0xff]
  %v205 = vsel %vm140, %v155, 0.0
  %206 = vadd.xlane.f32.xlu0 %v205
  %v207 = vpop.xlane.xlu0 %206
  %v208 = vsel %vm140, %v170, 0.0
  %209 = vadd.xlane.f32.xlu0 %v208
  %v210 = vpop.xlane.xlu0 %209
  %v211 = vsel %vm140, %v185, 0.0
  %212 = vadd.xlane.f32.xlu0 %v211
  %v213 = vpop.xlane.xlu0 %212
  %v214 = vsel %vm140, %v200, 0.0
  %215 = vadd.xlane.f32.xlu0 %v214
  %v216 = vpop.xlane.xlu0 %215
  %v217 = vadd.f32 %v201, %v207
  %v218 = vadd.f32 %v202, %v210
  %v219 = vadd.f32 %v203, %v213
  %v220 = vadd.f32 %v204, %v216
  %vm221 = vcmask 7168
  %222 = vst.msk [vmem:[%s2] sm:$0xff] %vm221, %v217
  %223 = vst.msk [vmem:[%s2 + $0x8] sm:$0xff] %vm221, %v218
  %224 = vst.msk [vmem:[%s2 + $0x10] sm:$0xff] %vm221, %v219
  %225 = vst.msk [vmem:[%s2 + $0x18] sm:$0xff] %vm221, %v220
  // Predicated region
  $region14: #{pairwise_encoder_forward.1} parent=0 // pred_check
    _
  $region15: #{pairwise_encoder_forward.1} parent=0 // pred_check_branch
    %227 = sbr.rel (0) target = $region17
  $region16: #{pairwise_encoder_forward.1} parent=0 // pred_region
    _
  $region17: #{pairwise_encoder_forward.1} parent=0 // pred_fallthru
    _
  // Predicated region
  $region18: #{pairwise_encoder_forward.1} parent=0 // pred_check
    _
  $region19: #{pairwise_encoder_forward.1} parent=0 // pred_check_branch
    %229 = sbr.rel (0) target = $region21
  $region20: #{pairwise_encoder_forward.1} parent=0 // pred_region
    _
  $region21: #{pairwise_encoder_forward.1} parent=0 // pred_fallthru
    _

</llo_original>
